<compile_context>
chip_gen: v7x
topology: tpu7x:2x2x1
jax: 0.10.0
libtpu: 0.0.40
codegen_flags: <defaults>
</compile_context>

<pallas_src>
import functools

import jax
import jax.numpy as jnp
from jax import lax
from jax.experimental import pallas as pl
from jax.experimental.pallas import tpu as pltpu  # noqa: F401  (imported per convention)


_LANE = 128
# PyTorch LSTM gate order is (i, f, g, o); kernel uses (i, f, o, g) so the three
# sigmoid gates are one contiguous lane-aligned slab and tanh (g) is last.
_GATE_PERM = (0, 1, 3, 2)


def _round_up(x, m):
    return (x + m - 1) // m * m


def _lstm_recurrence_kernel(xw_ref, whh_ref, h0_ref, c0_ref,
                            h_all_ref, hN_ref, cN_ref, *, seq_len, hidden_p):
    """Serial LSTM recurrence only (everything else is hoisted to XLA).

    xw_ref : (L, N, 4*Hp) precomputed x @ W_ih^T + (b_ih + b_hh),
             gate columns ordered (i, f, o, g), each gate zero-padded H -> Hp.
    whh_ref: (Hp, 4*Hp) recurrent weight (pre-transposed), same column layout,
             zero-padded rows/columns.
    h0/c0  : (N, Hp) initial state, zero-padded.
    Outputs: h_all (L, N, Hp) lane-dense hidden states; final h / c (N, Hp).
    """
    Hp = hidden_p
    whh = whh_ref[...]            # resident (Hp, 4Hp)
    h = h0_ref[...]               # (N, Hp) carried as values
    c = c0_ref[...]

    # Static full unroll over the short time axis (equivalent to
    # lax.fori_loop(..., unroll=True)); lets the scheduler overlap MXU/EUP
    # work across timesteps and removes all per-grid-step pipeline overhead.
    # TODO(synk): if L grows into the hundreds, switch back to a grid over time.
    for t in range(seq_len):
        gates = xw_ref[t] + jnp.dot(h, whh, preferred_element_type=jnp.float32)
        sig = jax.nn.sigmoid(gates[:, :3 * Hp])         # i, f, o in one slab
        i_g = sig[:, 0 * Hp:1 * Hp]
        f_g = sig[:, 1 * Hp:2 * Hp]
        o_g = sig[:, 2 * Hp:3 * Hp]
        g_g = jnp.tanh(gates[:, 3 * Hp:4 * Hp])
        c = f_g * c + i_g * g_g
        h = o_g * jnp.tanh(c)
        h_all_ref[t] = h                                # lane-dense (N, Hp) store

    # Final-state writes happen exactly once.
    hN_ref[...] = h
    cN_ref[...] = c


def lstm_recurrence(xw, whh, h0, c0):
    """xw: (L, N, 4*Hp); whh: (Hp, 4*Hp); h0/c0: (N, Hp)."""
    L, N, G = xw.shape
    Hp = whh.shape[0]
    assert G == 4 * Hp
    kernel = functools.partial(_lstm_recurrence_kernel, seq_len=L, hidden_p=Hp)
    # Gridless call: every operand fits comfortably in VMEM at these shapes
    # (< 0.5 MiB total), so all refs are whole-array VMEM blocks.
    return pl.pallas_call(
        kernel,
        out_shape=(
            jax.ShapeDtypeStruct((L, N, Hp), jnp.float32),   # h_all
            jax.ShapeDtypeStruct((N, Hp), jnp.float32),      # h_n
            jax.ShapeDtypeStruct((N, Hp), jnp.float32),      # c_n
        ),
    )(xw, whh, h0, c0)


def model_forward(params, x, prev_state):
    """Mirrors Model.forward: x (L, N) int ids; prev_state = (h0, c0), each (1, N, H)."""
    emb_table = params["embedding"]
    w_ih_t = params["w_ih_t"]          # (E, 4H), PyTorch gate order (i, f, g, o)
    w_hh_t = params["w_hh_t"]          # (H, 4H)
    b = params["b_gates"]              # (1, 4H)  (b_ih + b_hh)
    w_fc_t = params["w_fc_t"]          # (H, V)
    b_fc = params["b_fc"]              # (1, V)

    E = w_ih_t.shape[0]
    H = w_hh_t.shape[0]
    V = w_fc_t.shape[1]
    Hp = _round_up(H, _LANE)
    L, N = x.shape
    perm = jnp.asarray(_GATE_PERM)

    # --- Hoisted, time-parallel input projection (one big lane-dense matmul
    # instead of L tiny ones inside the serial loop). Plain XLA glue.
    embed = jnp.take(emb_table, x, axis=0)                       # (L, N, E)
    xw = embed.reshape(L * N, E) @ w_ih_t + b[0]                 # (L*N, 4H)
    # Reorder gates (i,f,g,o) -> (i,f,o,g); zero-pad each gate H -> Hp.
    xw = xw.reshape(L, N, 4, H)[:, :, perm, :]
    xw = jnp.pad(xw, ((0, 0), (0, 0), (0, 0), (0, Hp - H)))
    xw = xw.reshape(L, N, 4 * Hp)

    # --- Recurrent weight / initial state, reordered + zero-padded so every
    # kernel tile is a full (8, 128) vreg. Zero padding is numerically inert:
    # padded whh rows/cols and padded bias/h0/c0 lanes are all zero.
    whh = w_hh_t.reshape(H, 4, H)[:, perm, :]
    whh = jnp.pad(whh, ((0, Hp - H), (0, 0), (0, Hp - H))).reshape(Hp, 4 * Hp)
    h0 = jnp.pad(prev_state[0][0], ((0, 0), (0, Hp - H)))        # (N, Hp)
    c0 = jnp.pad(prev_state[1][0], ((0, 0), (0, Hp - H)))

    # --- Pallas kernel: only the serial recurrence.
    h_all, h_n, c_n = lstm_recurrence(xw, whh, h0, c0)

    # --- Hoisted, time-parallel output projection (one batched matmul).
    h_valid = h_all[..., :H].reshape(L * N, H)
    logits = (h_valid @ w_fc_t + b_fc[0]).reshape(L, N, V)

    return logits, (h_n[:, :H][None], c_n[:, :H][None])


def reference_forward(params, x, prev_state):
    """Pure-JAX reference (lax.scan) with PyTorch LSTM gate ordering i, f, g, o."""
    embed = jnp.take(params["embedding"], x, axis=0)
    H = params["w_hh_t"].shape[0]

    def step(carry, x_t):
        h, c = carry
        gates = x_t @ params["w_ih_t"] + h @ params["w_hh_t"] + params["b_gates"][0]
        i = jax.nn.sigmoid(gates[:, 0 * H:1 * H])
        f = jax.nn.sigmoid(gates[:, 1 * H:2 * H])
        g = jnp.tanh(gates[:, 2 * H:3 * H])
        o = jax.nn.sigmoid(gates[:, 3 * H:4 * H])
        c = f * c + i * g
        h = o * jnp.tanh(c)
        return (h, c), h

    (h_n, c_n), hs = lax.scan(step, (prev_state[0][0], prev_state[1][0]), embed)
    logits = hs @ params["w_fc_t"] + params["b_fc"][0]
    return logits, (h_n[None], c_n[None])


def init_params(key, n_vocab, embedding_dim, hidden):
    ks = jax.random.split(key, 6)
    scale = 0.1
    return {
        "embedding": scale * jax.random.normal(ks[0], (n_vocab, embedding_dim), jnp.float32),
        # Stored pre-transposed relative to PyTorch: (E, 4H) and (H, 4H).
        "w_ih_t": scale * jax.random.normal(ks[1], (embedding_dim, 4 * hidden), jnp.float32),
        "w_hh_t": scale * jax.random.normal(ks[2], (hidden, 4 * hidden), jnp.float32),
        # b_ih + b_hh combined, kept 2-D for clean lane layout.
        "b_gates": scale * jax.random.normal(ks[3], (1, 4 * hidden), jnp.float32),
        "w_fc_t": scale * jax.random.normal(ks[4], (hidden, n_vocab), jnp.float32),
        "b_fc": scale * jax.random.normal(ks[5], (1, n_vocab), jnp.float32),
    }


if __name__ == "__main__":
    # Small, module-consistent shapes: lstm_size = embedding_dim = 100 (as in
    # __init__), vocab = 50, seq_len = 6, batch = 8.
    SEQ, BATCH = 6, 8
    EMB, HID, VOCAB = 100, 100, 50

    key = jax.random.PRNGKey(0)
    pkey, xkey = jax.random.split(key)
    params = init_params(pkey, VOCAB, EMB, HID)

    x = jax.random.randint(xkey, (SEQ, BATCH), 0, VOCAB, dtype=jnp.int32)
    prev_state = (jnp.zeros((1, BATCH, HID), jnp.float32),
                  jnp.zeros((1, BATCH, HID), jnp.float32))

    logits, (h_n, c_n) = jax.jit(model_forward)(params, x, prev_state)
    jax.block_until_ready((logits, h_n, c_n))

    ref_logits, (ref_h, ref_c) = reference_forward(params, x, prev_state)
    assert logits.shape == (SEQ, BATCH, VOCAB)
    assert h_n.shape == (1, BATCH, HID) and c_n.shape == (1, BATCH, HID)
    assert jnp.allclose(logits, ref_logits, atol=1e-4, rtol=1e-4)
    assert jnp.allclose(h_n, ref_h, atol=1e-4, rtol=1e-4)
    assert jnp.allclose(c_n, ref_c, atol=1e-4, rtol=1e-4)

    print("KERNEL_OK")
</pallas_src>

<mosaic_0001>
module attributes {stable_mosaic.version = 11 : i64} {
  func.func @_lstm_recurrence_kernel(%arg0: memref<6x8x512xf32, #tpu.memory_space<vmem>>, %arg1: memref<128x512xf32, #tpu.memory_space<vmem>>, %arg2: memref<8x128xf32, #tpu.memory_space<vmem>>, %arg3: memref<8x128xf32, #tpu.memory_space<vmem>>, %arg4: memref<6x8x128xf32, #tpu.memory_space<vmem>>, %arg5: memref<8x128xf32, #tpu.memory_space<vmem>>, %arg6: memref<8x128xf32, #tpu.memory_space<vmem>>) attributes {dimension_semantics = [], scalar_prefetch = 0 : i64, scratch_operands = 0 : i64, tpu.core_type = #tpu.core_type<tc>} {
    %c0 = arith.constant 0 : index
    %c0_0 = arith.constant 0 : index
    %0 = vector.load %arg1[%c0, %c0_0] : memref<128x512xf32, #tpu.memory_space<vmem>>, vector<128x512xf32>
    %c0_1 = arith.constant 0 : index
    %c0_2 = arith.constant 0 : index
    %1 = vector.load %arg2[%c0_1, %c0_2] : memref<8x128xf32, #tpu.memory_space<vmem>>, vector<8x128xf32>
    %c0_3 = arith.constant 0 : index
    %c0_4 = arith.constant 0 : index
    %2 = vector.load %arg3[%c0_3, %c0_4] : memref<8x128xf32, #tpu.memory_space<vmem>>, vector<8x128xf32>
    %c0_5 = arith.constant 0 : index
    %c0_6 = arith.constant 0 : index
    %c0_7 = arith.constant 0 : index
    %3 = vector.load %arg0[%c0_5, %c0_6, %c0_7] : memref<6x8x512xf32, #tpu.memory_space<vmem>>, vector<1x8x512xf32>
    %4 = vector.shape_cast %3 : vector<1x8x512xf32> to vector<8x512xf32>
    %cst = arith.constant dense<0.000000e+00> : vector<8x512xf32>
    %5 = tpu.matmul %1, %0, %cst {dimension_numbers = #tpu.dot_dimension_numbers<[1], [0], [0], [1], [0, 0, 1, 1], [], []>} : vector<8x128xf32>, vector<128x512xf32>, vector<8x512xf32> -> vector<8x512xf32>
    %6 = arith.addf %4, %5 : vector<8x512xf32>
    %7 = vector.extract_strided_slice %6 {offsets = [0, 0], sizes = [8, 384], strides = [1, 1]} : vector<8x512xf32> to vector<8x384xf32>
    %8 = arith.negf %7 : vector<8x384xf32>
    %9 = math.exp %8 : vector<8x384xf32>
    %cst_8 = arith.constant 1.000000e+00 : f32
    %10 = vector.broadcast %cst_8 : f32 to vector<8x384xf32>
    %11 = arith.addf %10, %9 : vector<8x384xf32>
    %12 = arith.divf %10, %11 : vector<8x384xf32>
    %13 = vector.extract_strided_slice %12 {offsets = [0, 0], sizes = [8, 128], strides = [1, 1]} : vector<8x384xf32> to vector<8x128xf32>
    %14 = vector.extract_strided_slice %12 {offsets = [0, 128], sizes = [8, 128], strides = [1, 1]} : vector<8x384xf32> to vector<8x128xf32>
    %15 = vector.extract_strided_slice %12 {offsets = [0, 256], sizes = [8, 128], strides = [1, 1]} : vector<8x384xf32> to vector<8x128xf32>
    %16 = vector.extract_strided_slice %6 {offsets = [0, 384], sizes = [8, 128], strides = [1, 1]} : vector<8x512xf32> to vector<8x128xf32>
    %17 = math.tanh %16 : vector<8x128xf32>
    %18 = arith.mulf %14, %2 : vector<8x128xf32>
    %19 = arith.mulf %13, %17 : vector<8x128xf32>
    %20 = arith.addf %18, %19 : vector<8x128xf32>
    %21 = math.tanh %20 : vector<8x128xf32>
    %22 = arith.mulf %15, %21 : vector<8x128xf32>
    %c0_9 = arith.constant 0 : index
    %c0_10 = arith.constant 0 : index
    %c0_11 = arith.constant 0 : index
    %23 = vector.load %arg4[%c0_9, %c0_10, %c0_11] : memref<6x8x128xf32, #tpu.memory_space<vmem>>, vector<1x8x128xf32>
    %24 = vector.shape_cast %23 : vector<1x8x128xf32> to vector<8x128xf32>
    %25 = vector.shape_cast %22 : vector<8x128xf32> to vector<1x8x128xf32>
    tpu.vector_store %arg4[%c0_9, %c0_10, %c0_11], %25 {strides = array<i32>} : memref<6x8x128xf32, #tpu.memory_space<vmem>>, vector<1x8x128xf32>,
    %c1 = arith.constant 1 : index
    %c0_12 = arith.constant 0 : index
    %c0_13 = arith.constant 0 : index
    %26 = vector.load %arg0[%c1, %c0_12, %c0_13] : memref<6x8x512xf32, #tpu.memory_space<vmem>>, vector<1x8x512xf32>
    %27 = vector.shape_cast %26 : vector<1x8x512xf32> to vector<8x512xf32>
    %cst_14 = arith.constant dense<0.000000e+00> : vector<8x512xf32>
    %28 = tpu.matmul %22, %0, %cst_14 {dimension_numbers = #tpu.dot_dimension_numbers<[1], [0], [0], [1], [0, 0, 1, 1], [], []>} : vector<8x128xf32>, vector<128x512xf32>, vector<8x512xf32> -> vector<8x512xf32>
    %29 = arith.addf %27, %28 : vector<8x512xf32>
    %30 = vector.extract_strided_slice %29 {offsets = [0, 0], sizes = [8, 384], strides = [1, 1]} : vector<8x512xf32> to vector<8x384xf32>
    %31 = arith.negf %30 : vector<8x384xf32>
    %32 = math.exp %31 : vector<8x384xf32>
    %cst_15 = arith.constant 1.000000e+00 : f32
    %33 = vector.broadcast %cst_15 : f32 to vector<8x384xf32>
    %34 = arith.addf %33, %32 : vector<8x384xf32>
    %35 = arith.divf %33, %34 : vector<8x384xf32>
    %36 = vector.extract_strided_slice %35 {offsets = [0, 0], sizes = [8, 128], strides = [1, 1]} : vector<8x384xf32> to vector<8x128xf32>
    %37 = vector.extract_strided_slice %35 {offsets = [0, 128], sizes = [8, 128], strides = [1, 1]} : vector<8x384xf32> to vector<8x128xf32>
    %38 = vector.extract_strided_slice %35 {offsets = [0, 256], sizes = [8, 128], strides = [1, 1]} : vector<8x384xf32> to vector<8x128xf32>
    %39 = vector.extract_strided_slice %29 {offsets = [0, 384], sizes = [8, 128], strides = [1, 1]} : vector<8x512xf32> to vector<8x128xf32>
    %40 = math.tanh %39 : vector<8x128xf32>
    %41 = arith.mulf %37, %20 : vector<8x128xf32>
    %42 = arith.mulf %36, %40 : vector<8x128xf32>
    %43 = arith.addf %41, %42 : vector<8x128xf32>
    %44 = math.tanh %43 : vector<8x128xf32>
    %45 = arith.mulf %38, %44 : vector<8x128xf32>
    %c1_16 = arith.constant 1 : index
    %c0_17 = arith.constant 0 : index
    %c0_18 = arith.constant 0 : index
    %46 = vector.load %arg4[%c1_16, %c0_17, %c0_18] : memref<6x8x128xf32, #tpu.memory_space<vmem>>, vector<1x8x128xf32>
    %47 = vector.shape_cast %46 : vector<1x8x128xf32> to vector<8x128xf32>
    %48 = vector.shape_cast %45 : vector<8x128xf32> to vector<1x8x128xf32>
    tpu.vector_store %arg4[%c1_16, %c0_17, %c0_18], %48 {strides = array<i32>} : memref<6x8x128xf32, #tpu.memory_space<vmem>>, vector<1x8x128xf32>,
    %c2 = arith.constant 2 : index
    %c0_19 = arith.constant 0 : index
    %c0_20 = arith.constant 0 : index
    %49 = vector.load %arg0[%c2, %c0_19, %c0_20] : memref<6x8x512xf32, #tpu.memory_space<vmem>>, vector<1x8x512xf32>
    %50 = vector.shape_cast %49 : vector<1x8x512xf32> to vector<8x512xf32>
    %cst_21 = arith.constant dense<0.000000e+00> : vector<8x512xf32>
    %51 = tpu.matmul %45, %0, %cst_21 {dimension_numbers = #tpu.dot_dimension_numbers<[1], [0], [0], [1], [0, 0, 1, 1], [], []>} : vector<8x128xf32>, vector<128x512xf32>, vector<8x512xf32> -> vector<8x512xf32>
    %52 = arith.addf %50, %51 : vector<8x512xf32>
    %53 = vector.extract_strided_slice %52 {offsets = [0, 0], sizes = [8, 384], strides = [1, 1]} : vector<8x512xf32> to vector<8x384xf32>
    %54 = arith.negf %53 : vector<8x384xf32>
    %55 = math.exp %54 : vector<8x384xf32>
    %cst_22 = arith.constant 1.000000e+00 : f32
    %56 = vector.broadcast %cst_22 : f32 to vector<8x384xf32>
    %57 = arith.addf %56, %55 : vector<8x384xf32>
    %58 = arith.divf %56, %57 : vector<8x384xf32>
    %59 = vector.extract_strided_slice %58 {offsets = [0, 0], sizes = [8, 128], strides = [1, 1]} : vector<8x384xf32> to vector<8x128xf32>
    %60 = vector.extract_strided_slice %58 {offsets = [0, 128], sizes = [8, 128], strides = [1, 1]} : vector<8x384xf32> to vector<8x128xf32>
    %61 = vector.extract_strided_slice %58 {offsets = [0, 256], sizes = [8, 128], strides = [1, 1]} : vector<8x384xf32> to vector<8x128xf32>
    %62 = vector.extract_strided_slice %52 {offsets = [0, 384], sizes = [8, 128], strides = [1, 1]} : vector<8x512xf32> to vector<8x128xf32>
    %63 = math.tanh %62 : vector<8x128xf32>
    %64 = arith.mulf %60, %43 : vector<8x128xf32>
    %65 = arith.mulf %59, %63 : vector<8x128xf32>
    %66 = arith.addf %64, %65 : vector<8x128xf32>
    %67 = math.tanh %66 : vector<8x128xf32>
    %68 = arith.mulf %61, %67 : vector<8x128xf32>
    %c2_23 = arith.constant 2 : index
    %c0_24 = arith.constant 0 : index
    %c0_25 = arith.constant 0 : index
    %69 = vector.load %arg4[%c2_23, %c0_24, %c0_25] : memref<6x8x128xf32, #tpu.memory_space<vmem>>, vector<1x8x128xf32>
    %70 = vector.shape_cast %69 : vector<1x8x128xf32> to vector<8x128xf32>
    %71 = vector.shape_cast %68 : vector<8x128xf32> to vector<1x8x128xf32>
    tpu.vector_store %arg4[%c2_23, %c0_24, %c0_25], %71 {strides = array<i32>} : memref<6x8x128xf32, #tpu.memory_space<vmem>>, vector<1x8x128xf32>,
    %c3 = arith.constant 3 : index
    %c0_26 = arith.constant 0 : index
    %c0_27 = arith.constant 0 : index
    %72 = vector.load %arg0[%c3, %c0_26, %c0_27] : memref<6x8x512xf32, #tpu.memory_space<vmem>>, vector<1x8x512xf32>
    %73 = vector.shape_cast %72 : vector<1x8x512xf32> to vector<8x512xf32>
    %cst_28 = arith.constant dense<0.000000e+00> : vector<8x512xf32>
    %74 = tpu.matmul %68, %0, %cst_28 {dimension_numbers = #tpu.dot_dimension_numbers<[1], [0], [0], [1], [0, 0, 1, 1], [], []>} : vector<8x128xf32>, vector<128x512xf32>, vector<8x512xf32> -> vector<8x512xf32>
    %75 = arith.addf %73, %74 : vector<8x512xf32>
    %76 = vector.extract_strided_slice %75 {offsets = [0, 0], sizes = [8, 384], strides = [1, 1]} : vector<8x512xf32> to vector<8x384xf32>
    %77 = arith.negf %76 : vector<8x384xf32>
    %78 = math.exp %77 : vector<8x384xf32>
    %cst_29 = arith.constant 1.000000e+00 : f32
    %79 = vector.broadcast %cst_29 : f32 to vector<8x384xf32>
    %80 = arith.addf %79, %78 : vector<8x384xf32>
    %81 = arith.divf %79, %80 : vector<8x384xf32>
    %82 = vector.extract_strided_slice %81 {offsets = [0, 0], sizes = [8, 128], strides = [1, 1]} : vector<8x384xf32> to vector<8x128xf32>
    %83 = vector.extract_strided_slice %81 {offsets = [0, 128], sizes = [8, 128], strides = [1, 1]} : vector<8x384xf32> to vector<8x128xf32>
    %84 = vector.extract_strided_slice %81 {offsets = [0, 256], sizes = [8, 128], strides = [1, 1]} : vector<8x384xf32> to vector<8x128xf32>
    %85 = vector.extract_strided_slice %75 {offsets = [0, 384], sizes = [8, 128], strides = [1, 1]} : vector<8x512xf32> to vector<8x128xf32>
    %86 = math.tanh %85 : vector<8x128xf32>
    %87 = arith.mulf %83, %66 : vector<8x128xf32>
    %88 = arith.mulf %82, %86 : vector<8x128xf32>
    %89 = arith.addf %87, %88 : vector<8x128xf32>
    %90 = math.tanh %89 : vector<8x128xf32>
    %91 = arith.mulf %84, %90 : vector<8x128xf32>
    %c3_30 = arith.constant 3 : index
    %c0_31 = arith.constant 0 : index
    %c0_32 = arith.constant 0 : index
    %92 = vector.load %arg4[%c3_30, %c0_31, %c0_32] : memref<6x8x128xf32, #tpu.memory_space<vmem>>, vector<1x8x128xf32>
    %93 = vector.shape_cast %92 : vector<1x8x128xf32> to vector<8x128xf32>
    %94 = vector.shape_cast %91 : vector<8x128xf32> to vector<1x8x128xf32>
    tpu.vector_store %arg4[%c3_30, %c0_31, %c0_32], %94 {strides = array<i32>} : memref<6x8x128xf32, #tpu.memory_space<vmem>>, vector<1x8x128xf32>,
    %c4 = arith.constant 4 : index
    %c0_33 = arith.constant 0 : index
    %c0_34 = arith.constant 0 : index
    %95 = vector.load %arg0[%c4, %c0_33, %c0_34] : memref<6x8x512xf32, #tpu.memory_space<vmem>>, vector<1x8x512xf32>
    %96 = vector.shape_cast %95 : vector<1x8x512xf32> to vector<8x512xf32>
    %cst_35 = arith.constant dense<0.000000e+00> : vector<8x512xf32>
    %97 = tpu.matmul %91, %0, %cst_35 {dimension_numbers = #tpu.dot_dimension_numbers<[1], [0], [0], [1], [0, 0, 1, 1], [], []>} : vector<8x128xf32>, vector<128x512xf32>, vector<8x512xf32> -> vector<8x512xf32>
    %98 = arith.addf %96, %97 : vector<8x512xf32>
    %99 = vector.extract_strided_slice %98 {offsets = [0, 0], sizes = [8, 384], strides = [1, 1]} : vector<8x512xf32> to vector<8x384xf32>
    %100 = arith.negf %99 : vector<8x384xf32>
    %101 = math.exp %100 : vector<8x384xf32>
    %cst_36 = arith.constant 1.000000e+00 : f32
    %102 = vector.broadcast %cst_36 : f32 to vector<8x384xf32>
    %103 = arith.addf %102, %101 : vector<8x384xf32>
    %104 = arith.divf %102, %103 : vector<8x384xf32>
    %105 = vector.extract_strided_slice %104 {offsets = [0, 0], sizes = [8, 128], strides = [1, 1]} : vector<8x384xf32> to vector<8x128xf32>
    %106 = vector.extract_strided_slice %104 {offsets = [0, 128], sizes = [8, 128], strides = [1, 1]} : vector<8x384xf32> to vector<8x128xf32>
    %107 = vector.extract_strided_slice %104 {offsets = [0, 256], sizes = [8, 128], strides = [1, 1]} : vector<8x384xf32> to vector<8x128xf32>
    %108 = vector.extract_strided_slice %98 {offsets = [0, 384], sizes = [8, 128], strides = [1, 1]} : vector<8x512xf32> to vector<8x128xf32>
    %109 = math.tanh %108 : vector<8x128xf32>
    %110 = arith.mulf %106, %89 : vector<8x128xf32>
    %111 = arith.mulf %105, %109 : vector<8x128xf32>
    %112 = arith.addf %110, %111 : vector<8x128xf32>
    %113 = math.tanh %112 : vector<8x128xf32>
    %114 = arith.mulf %107, %113 : vector<8x128xf32>
    %c4_37 = arith.constant 4 : index
    %c0_38 = arith.constant 0 : index
    %c0_39 = arith.constant 0 : index
    %115 = vector.load %arg4[%c4_37, %c0_38, %c0_39] : memref<6x8x128xf32, #tpu.memory_space<vmem>>, vector<1x8x128xf32>
    %116 = vector.shape_cast %115 : vector<1x8x128xf32> to vector<8x128xf32>
    %117 = vector.shape_cast %114 : vector<8x128xf32> to vector<1x8x128xf32>
    tpu.vector_store %arg4[%c4_37, %c0_38, %c0_39], %117 {strides = array<i32>} : memref<6x8x128xf32, #tpu.memory_space<vmem>>, vector<1x8x128xf32>,
    %c5 = arith.constant 5 : index
    %c0_40 = arith.constant 0 : index
    %c0_41 = arith.constant 0 : index
    %118 = vector.load %arg0[%c5, %c0_40, %c0_41] : memref<6x8x512xf32, #tpu.memory_space<vmem>>, vector<1x8x512xf32>
    %119 = vector.shape_cast %118 : vector<1x8x512xf32> to vector<8x512xf32>
    %cst_42 = arith.constant dense<0.000000e+00> : vector<8x512xf32>
    %120 = tpu.matmul %114, %0, %cst_42 {dimension_numbers = #tpu.dot_dimension_numbers<[1], [0], [0], [1], [0, 0, 1, 1], [], []>} : vector<8x128xf32>, vector<128x512xf32>, vector<8x512xf32> -> vector<8x512xf32>
    %121 = arith.addf %119, %120 : vector<8x512xf32>
    %122 = vector.extract_strided_slice %121 {offsets = [0, 0], sizes = [8, 384], strides = [1, 1]} : vector<8x512xf32> to vector<8x384xf32>
    %123 = arith.negf %122 : vector<8x384xf32>
    %124 = math.exp %123 : vector<8x384xf32>
    %cst_43 = arith.constant 1.000000e+00 : f32
    %125 = vector.broadcast %cst_43 : f32 to vector<8x384xf32>
    %126 = arith.addf %125, %124 : vector<8x384xf32>
    %127 = arith.divf %125, %126 : vector<8x384xf32>
    %128 = vector.extract_strided_slice %127 {offsets = [0, 0], sizes = [8, 128], strides = [1, 1]} : vector<8x384xf32> to vector<8x128xf32>
    %129 = vector.extract_strided_slice %127 {offsets = [0, 128], sizes = [8, 128], strides = [1, 1]} : vector<8x384xf32> to vector<8x128xf32>
    %130 = vector.extract_strided_slice %127 {offsets = [0, 256], sizes = [8, 128], strides = [1, 1]} : vector<8x384xf32> to vector<8x128xf32>
    %131 = vector.extract_strided_slice %121 {offsets = [0, 384], sizes = [8, 128], strides = [1, 1]} : vector<8x512xf32> to vector<8x128xf32>
    %132 = math.tanh %131 : vector<8x128xf32>
    %133 = arith.mulf %129, %112 : vector<8x128xf32>
    %134 = arith.mulf %128, %132 : vector<8x128xf32>
    %135 = arith.addf %133, %134 : vector<8x128xf32>
    %136 = math.tanh %135 : vector<8x128xf32>
    %137 = arith.mulf %130, %136 : vector<8x128xf32>
    %c5_44 = arith.constant 5 : index
    %c0_45 = arith.constant 0 : index
    %c0_46 = arith.constant 0 : index
    %138 = vector.load %arg4[%c5_44, %c0_45, %c0_46] : memref<6x8x128xf32, #tpu.memory_space<vmem>>, vector<1x8x128xf32>
    %139 = vector.shape_cast %138 : vector<1x8x128xf32> to vector<8x128xf32>
    %140 = vector.shape_cast %137 : vector<8x128xf32> to vector<1x8x128xf32>
    tpu.vector_store %arg4[%c5_44, %c0_45, %c0_46], %140 {strides = array<i32>} : memref<6x8x128xf32, #tpu.memory_space<vmem>>, vector<1x8x128xf32>,
    %c0_47 = arith.constant 0 : index
    %c0_48 = arith.constant 0 : index
    %141 = vector.load %arg5[%c0_47, %c0_48] : memref<8x128xf32, #tpu.memory_space<vmem>>, vector<8x128xf32>
    tpu.vector_store %arg5[%c0_47, %c0_48], %137 {strides = array<i32>} : memref<8x128xf32, #tpu.memory_space<vmem>>, vector<8x128xf32>,
    %c0_49 = arith.constant 0 : index
    %c0_50 = arith.constant 0 : index
    %142 = vector.load %arg6[%c0_49, %c0_50] : memref<8x128xf32, #tpu.memory_space<vmem>>, vector<8x128xf32>
    tpu.vector_store %arg6[%c0_49, %c0_50], %135 {strides = array<i32>} : memref<8x128xf32, #tpu.memory_space<vmem>>, vector<8x128xf32>,
    return
  }
}

</mosaic_0001>

<llo_original>
// kernel: model_forward.1
$region0: #{model_forward.1}
  #allocation0 [shape = 'u32[]', space=smem, size = 0x4, offset = 0x4, fixed_abs, tag = 'smem constant byte address 0x4 - core index']
  #allocation1 [shape = 'u32[144,128]{1,0:T(1,128)}', space=vmem, size = 0x12000, scoped, tag = 'internal scratch']
  %s0 = inlined_call_operand.vmem [shape: f32[6,8,512], index: 0, kind: input, shape index: {}]
  %s1 = inlined_call_operand.vmem [shape: f32[128,512], index: 1, kind: input, shape index: {}]
  %s2 = inlined_call_operand.vmem [shape: f32[8,128], index: 2, kind: input, shape index: {}]
  %s3 = inlined_call_operand.vmem [shape: f32[8,128], index: 3, kind: input, shape index: {}]
  %s4 = inlined_call_operand.vmem [shape: f32[6,8,128], index: 4, kind: output, shape index: {0}]
  %s5 = inlined_call_operand.vmem [shape: f32[8,128], index: 5, kind: output, shape index: {1}]
  %s6 = inlined_call_operand.vmem [shape: f32[8,128], index: 6, kind: output, shape index: {2}]
  %7 = xla_tuple %s4, %s5, %s6
  %s8 = sld [smem:[#allocation0]]
  $region42: #{model_forward.1} parent=0
    _
  %s10 = ssub.s32 1, %s8
  %s11 = scalar_select 0, %s10, %s8
  // Predicated region
  $region2: #{model_forward.1} parent=0 // pred_check
    _
  $region3: #{model_forward.1} parent=0 // pred_check_branch
    %13 = sbr.rel (0) target = $region5
  $region4: #{model_forward.1} parent=0 // pred_region
    _
  $region5: #{model_forward.1} parent=0 // pred_fallthru
    _
  // Predicated region
  $region6: #{model_forward.1} parent=0 // pred_check
    _
  $region7: #{model_forward.1} parent=0 // pred_check_branch
    %15 = sbr.rel (0) target = $region9
  $region8: #{model_forward.1} parent=0 // pred_region
    _
  $region9: #{model_forward.1} parent=0 // pred_fallthru
    _
  // Predicated region
  $region10: #{model_forward.1} parent=0 // pred_check
    _
  $region11: #{model_forward.1} parent=0 // pred_check_branch
    %17 = sbr.rel (0) target = $region13
  $region12: #{model_forward.1} parent=0 // pred_region
    _
  $region13: #{model_forward.1} parent=0 // pred_fallthru
    _
  // Predicated region
  $region14: #{model_forward.1} parent=0 // pred_check
    _
  $region15: #{model_forward.1} parent=0 // pred_check_branch
    %19 = sbr.rel (0) target = $region17
  $region16: #{model_forward.1} parent=0 // pred_region
    _
  $region17: #{model_forward.1} parent=0 // pred_fallthru
    _
  %v20 = vld [vmem:[%s1] sm:$0xff]
  %v21 = vld [vmem:[%s1 + $0x8] sm:$0xff]
  %v22 = vld [vmem:[%s1 + $0x10] sm:$0xff]
  %v23 = vld [vmem:[%s1 + $0x18] sm:$0xff]
  %v24 = vld [vmem:[%s1 + $0x20] sm:$0xff]
  %v25 = vld [vmem:[%s1 + $0x28] sm:$0xff]
  %v26 = vld [vmem:[%s1 + $0x30] sm:$0xff]
  %v27 = vld [vmem:[%s1 + $0x38] sm:$0xff]
  %v28 = vld [vmem:[%s1 + $0x40] sm:$0xff]
  %v29 = vld [vmem:[%s1 + $0x48] sm:$0xff]
  %v30 = vld [vmem:[%s1 + $0x50] sm:$0xff]
  %v31 = vld [vmem:[%s1 + $0x58] sm:$0xff]
  %v32 = vld [vmem:[%s1 + $0x60] sm:$0xff]
  %v33 = vld [vmem:[%s1 + $0x68] sm:$0xff]
  %v34 = vld [vmem:[%s1 + $0x70] sm:$0xff]
  %v35 = vld [vmem:[%s1 + $0x78] sm:$0xff]
  %v36 = vld [vmem:[%s1 + $0x80] sm:$0xff]
  %v37 = vld [vmem:[%s1 + $0x88] sm:$0xff]
  %v38 = vld [vmem:[%s1 + $0x90] sm:$0xff]
  %v39 = vld [vmem:[%s1 + $0x98] sm:$0xff]
  %v40 = vld [vmem:[%s1 + $0xa0] sm:$0xff]
  %v41 = vld [vmem:[%s1 + $0xa8] sm:$0xff]
  %v42 = vld [vmem:[%s1 + $0xb0] sm:$0xff]
  %v43 = vld [vmem:[%s1 + $0xb8] sm:$0xff]
  %v44 = vld [vmem:[%s1 + $0xc0] sm:$0xff]
  %v45 = vld [vmem:[%s1 + $0xc8] sm:$0xff]
  %v46 = vld [vmem:[%s1 + $0xd0] sm:$0xff]
  %v47 = vld [vmem:[%s1 + $0xd8] sm:$0xff]
  %v48 = vld [vmem:[%s1 + $0xe0] sm:$0xff]
  %v49 = vld [vmem:[%s1 + $0xe8] sm:$0xff]
  %v50 = vld [vmem:[%s1 + $0xf0] sm:$0xff]
  %v51 = vld [vmem:[%s1 + $0xf8] sm:$0xff]
  %v52 = vld [vmem:[%s1 + $0x100] sm:$0xff]
  %v53 = vld [vmem:[%s1 + $0x108] sm:$0xff]
  %v54 = vld [vmem:[%s1 + $0x110] sm:$0xff]
  %v55 = vld [vmem:[%s1 + $0x118] sm:$0xff]
  %v56 = vld [vmem:[%s1 + $0x120] sm:$0xff]
  %v57 = vld [vmem:[%s1 + $0x128] sm:$0xff]
  %v58 = vld [vmem:[%s1 + $0x130] sm:$0xff]
  %v59 = vld [vmem:[%s1 + $0x138] sm:$0xff]
  %v60 = vld [vmem:[%s1 + $0x140] sm:$0xff]
  %v61 = vld [vmem:[%s1 + $0x148] sm:$0xff]
  %v62 = vld [vmem:[%s1 + $0x150] sm:$0xff]
  %v63 = vld [vmem:[%s1 + $0x158] sm:$0xff]
  %v64 = vld [vmem:[%s1 + $0x160] sm:$0xff]
  %v65 = vld [vmem:[%s1 + $0x168] sm:$0xff]
  %v66 = vld [vmem:[%s1 + $0x170] sm:$0xff]
  %v67 = vld [vmem:[%s1 + $0x178] sm:$0xff]
  %v68 = vld [vmem:[%s1 + $0x180] sm:$0xff]
  %v69 = vld [vmem:[%s1 + $0x188] sm:$0xff]
  %v70 = vld [vmem:[%s1 + $0x190] sm:$0xff]
  %v71 = vld [vmem:[%s1 + $0x198] sm:$0xff]
  %v72 = vld [vmem:[%s1 + $0x1a0] sm:$0xff]
  %v73 = vld [vmem:[%s1 + $0x1a8] sm:$0xff]
  %v74 = vld [vmem:[%s1 + $0x1b0] sm:$0xff]
  %v75 = vld [vmem:[%s1 + $0x1b8] sm:$0xff]
  %v76 = vld [vmem:[%s1 + $0x1c0] sm:$0xff]
  %v77 = vld [vmem:[%s1 + $0x1c8] sm:$0xff]
  %v78 = vld [vmem:[%s1 + $0x1d0] sm:$0xff]
  %v79 = vld [vmem:[%s1 + $0x1d8] sm:$0xff]
  %v80 = vld [vmem:[%s1 + $0x1e0] sm:$0xff]
  %v81 = vld [vmem:[%s1 + $0x1e8] sm:$0xff]
  %v82 = vld [vmem:[%s1 + $0x1f0] sm:$0xff]
  %v83 = vld [vmem:[%s1 + $0x1f8] sm:$0xff]
  %v84 = vld [vmem:[%s2] sm:$0xff]
  %v85 = vld [vmem:[%s3] sm:$0xff]
  %v86 = vld [vmem:[%s0] sm:$0xff]
  %v87 = vld [vmem:[%s0 + $0x8] sm:$0xff]
  %v88 = vld [vmem:[%s0 + $0x10] sm:$0xff]
  %v89 = vld [vmem:[%s0 + $0x18] sm:$0xff]
  %90 = vmatprep.subr.mxu0 %v21
  %91 = vmatpush1.msra.mxu0 %v20
  %92 = vmatprep.subr.mxu0 %v25
  %93 = vmatpush1.msra.mxu0 %v24
  %94 = vmatprep.subr.mxu0 %v29
  %95 = vmatpush1.msra.mxu0 %v28
  %96 = vmatprep.subr.mxu0 %v33
  %97 = vmatpush1.msra.mxu0 %v32
  %98 = vmatprep.subr.mxu0 %v37
  %99 = vmatpush1.msra.mxu0 %v36
  %100 = vmatprep.subr.mxu0 %v41
  %101 = vmatpush1.msra.mxu0 %v40
  %102 = vmatprep.subr.mxu0 %v45
  %103 = vmatpush1.msra.mxu0 %v44
  %104 = vmatprep.subr.mxu0 %v49
  %105 = vmatpush1.msra.mxu0 %v48
  %106 = vmatprep.subr.mxu0 %v53
  %107 = vmatpush1.msra.mxu0 %v52
  %108 = vmatprep.subr.mxu0 %v57
  %109 = vmatpush1.msra.mxu0 %v56
  %110 = vmatprep.subr.mxu0 %v61
  %111 = vmatpush1.msra.mxu0 %v60
  %112 = vmatprep.subr.mxu0 %v65
  %113 = vmatpush1.msra.mxu0 %v64
  %114 = vmatprep.subr.mxu0 %v69
  %115 = vmatpush1.msra.mxu0 %v68
  %116 = vmatprep.subr.mxu0 %v73
  %117 = vmatpush1.msra.mxu0 %v72
  %118 = vmatprep.subr.mxu0 %v77
  %119 = vmatpush1.msra.mxu0 %v76
  %120 = vmatprep.subr.mxu0 %v81
  %121 = vmatpush1.msra.mxu0 %v80
  %122 = vmatprep.subr.mxu0 0.0
  %123 = vmatpush1.msra.mxu0 0.0
  %124 = vmatprep.subr.mxu0 0.0
  %125 = vmatpush1.msra.mxu0 0.0
  %126 = vmatprep.subr.mxu0 0.0
  %127 = vmatpush1.msra.mxu0 0.0
  %128 = vmatprep.subr.mxu0 0.0
  %129 = vmatpush1.msra.mxu0 0.0
  %130 = vmatprep.subr.mxu0 0.0
  %131 = vmatpush1.msra.mxu0 0.0
  %132 = vmatprep.subr.mxu0 0.0
  %133 = vmatpush1.msra.mxu0 0.0
  %134 = vmatprep.subr.mxu0 0.0
  %135 = vmatpush1.msra.mxu0 0.0
  %136 = vmatprep.subr.mxu0 0.0
  %137 = vmatpush1.msra.mxu0 0.0
  %138 = vmatprep.subr.mxu0 0.0
  %139 = vmatpush1.msra.mxu0 0.0
  %140 = vmatprep.subr.mxu0 0.0
  %141 = vmatpush1.msra.mxu0 0.0
  %142 = vmatprep.subr.mxu0 0.0
  %143 = vmatpush1.msra.mxu0 0.0
  %144 = vmatprep.subr.mxu0 0.0
  %145 = vmatpush1.msra.mxu0 0.0
  %146 = vmatprep.subr.mxu0 0.0
  %147 = vmatpush1.msra.mxu0 0.0
  %148 = vmatprep.subr.mxu0 0.0
  %149 = vmatpush1.msra.mxu0 0.0
  %150 = vmatprep.subr.mxu0 0.0
  %151 = vmatpush1.msra.mxu0 0.0
  %152 = vmatprep.subr.mxu0 0.0
  %153 = vmatpush1.msra.mxu0 0.0
  %154 = vmatprep.mubr.f32.mxu0 0.0
  %155 = vmatmul.mubr.f32.gmra.mrb[0].mxu0 %v84
  %v156 = vpop.f32.mrb[0].mxu0
  %v157 = vadd.f32 0.0, %v156
  %v158 = vpop.f32.mrb[0].mxu0
  %v159 = vadd.f32 0.0, %v158
  %160 = vdwg.mxu0
  %161 = vmatprep.subr.mxu0 %v23
  %162 = vmatpush1.msra.mxu0 %v22
  %163 = vmatprep.subr.mxu0 %v27
  %164 = vmatpush1.msra.mxu0 %v26
  %165 = vmatprep.subr.mxu0 %v31
  %166 = vmatpush1.msra.mxu0 %v30
  %167 = vmatprep.subr.mxu0 %v35
  %168 = vmatpush1.msra.mxu0 %v34
  %169 = vmatprep.subr.mxu0 %v39
  %170 = vmatpush1.msra.mxu0 %v38
  %171 = vmatprep.subr.mxu0 %v43
  %172 = vmatpush1.msra.mxu0 %v42
  %173 = vmatprep.subr.mxu0 %v47
  %174 = vmatpush1.msra.mxu0 %v46
  %175 = vmatprep.subr.mxu0 %v51
  %176 = vmatpush1.msra.mxu0 %v50
  %177 = vmatprep.subr.mxu0 %v55
  %178 = vmatpush1.msra.mxu0 %v54
  %179 = vmatprep.subr.mxu0 %v59
  %180 = vmatpush1.msra.mxu0 %v58
  %181 = vmatprep.subr.mxu0 %v63
  %182 = vmatpush1.msra.mxu0 %v62
  %183 = vmatprep.subr.mxu0 %v67
  %184 = vmatpush1.msra.mxu0 %v66
  %185 = vmatprep.subr.mxu0 %v71
  %186 = vmatpush1.msra.mxu0 %v70
  %187 = vmatprep.subr.mxu0 %v75
  %188 = vmatpush1.msra.mxu0 %v74
  %189 = vmatprep.subr.mxu0 %v79
  %190 = vmatpush1.msra.mxu0 %v78
  %191 = vmatprep.subr.mxu0 %v83
  %192 = vmatpush1.msra.mxu0 %v82
  %193 = vmatprep.subr.mxu0 0.0
  %194 = vmatpush1.msra.mxu0 0.0
  %195 = vmatprep.subr.mxu0 0.0
  %196 = vmatpush1.msra.mxu0 0.0
  %197 = vmatprep.subr.mxu0 0.0
  %198 = vmatpush1.msra.mxu0 0.0
  %199 = vmatprep.subr.mxu0 0.0
  %200 = vmatpush1.msra.mxu0 0.0
  %201 = vmatprep.subr.mxu0 0.0
  %202 = vmatpush1.msra.mxu0 0.0
  %203 = vmatprep.subr.mxu0 0.0
  %204 = vmatpush1.msra.mxu0 0.0
  %205 = vmatprep.subr.mxu0 0.0
  %206 = vmatpush1.msra.mxu0 0.0
  %207 = vmatprep.subr.mxu0 0.0
  %208 = vmatpush1.msra.mxu0 0.0
  %209 = vmatprep.subr.mxu0 0.0
  %210 = vmatpush1.msra.mxu0 0.0
  %211 = vmatprep.subr.mxu0 0.0
  %212 = vmatpush1.msra.mxu0 0.0
  %213 = vmatprep.subr.mxu0 0.0
  %214 = vmatpush1.msra.mxu0 0.0
  %215 = vmatprep.subr.mxu0 0.0
  %216 = vmatpush1.msra.mxu0 0.0
  %217 = vmatprep.subr.mxu0 0.0
  %218 = vmatpush1.msra.mxu0 0.0
  %219 = vmatprep.subr.mxu0 0.0
  %220 = vmatpush1.msra.mxu0 0.0
  %221 = vmatprep.subr.mxu0 0.0
  %222 = vmatpush1.msra.mxu0 0.0
  %223 = vmatprep.subr.mxu0 0.0
  %224 = vmatpush1.msra.mxu0 0.0
  %225 = vmatprep.mubr.f32.mxu0 0.0
  %226 = vmatmul.mubr.f32.gmra.mrb[0].mxu0 %v84
  %v227 = vpop.f32.mrb[0].mxu0
  %v228 = vadd.f32 0.0, %v227
  %v229 = vpop.f32.mrb[0].mxu0
  %v230 = vadd.f32 0.0, %v229
  %231 = vdwg.mxu0
  %v232 = vadd.f32 %v86, %v157
  %v233 = vadd.f32 %v87, %v159
  %v234 = vadd.f32 %v88, %v228
  %v235 = vadd.f32 %v89, %v230
  %v236 = vxor.u32 %v232, 2147483648
  %v237 = vxor.u32 %v233, 2147483648
  %v238 = vxor.u32 %v234, 2147483648
  %v239 = vmul.f32 %v236, 1.442695
  %v240 = vpow.pop %v239
  %v241 = vmul.f32 %v237, 1.442695
  %v242 = vpow.pop %v241
  %v243 = vmul.f32 %v238, 1.442695
  %v244 = vpow.pop %v243
  %v245 = vadd.f32 %v240, 1.0
  %v246 = vadd.f32 %v242, 1.0
  %v247 = vadd.f32 %v244, 1.0
  %v248 = vrcp.pop %v245
  %v249 = vmul.f32 1.0, %v248
  %v250 = vrcp.pop %v246
  %v251 = vmul.f32 1.0, %v250
  %v252 = vrcp.pop %v247
  %v253 = vmul.f32 1.0, %v252
  %v254 = vtanh.pop %v235
  %v255 = vmul.f32 %v251, %v85
  %v256 = vmul.f32 %v249, %v254
  %v257 = vadd.f32 %v255, %v256
  %v258 = vtanh.pop %v257
  %v259 = vmul.f32 %v253, %v258
  %260 = vst [vmem:[%s4] sm:$0xff] %v259
  %s261 = scalar_lea.vmem %s0, 32
  %v262 = vld [vmem:[%s261] sm:$0xff]
  %v263 = vld [vmem:[%s261 + $0x8] sm:$0xff]
  %v264 = vld [vmem:[%s261 + $0x10] sm:$0xff]
  %v265 = vld [vmem:[%s261 + $0x18] sm:$0xff]
  %266 = vmatprep.subr.mxu0 %v21
  %267 = vmatpush1.msra.mxu0 %v20
  %268 = vmatprep.subr.mxu0 %v25
  %269 = vmatpush1.msra.mxu0 %v24
  %270 = vmatprep.subr.mxu0 %v29
  %271 = vmatpush1.msra.mxu0 %v28
  %272 = vmatprep.subr.mxu0 %v33
  %273 = vmatpush1.msra.mxu0 %v32
  %274 = vmatprep.subr.mxu0 %v37
  %275 = vmatpush1.msra.mxu0 %v36
  %276 = vmatprep.subr.mxu0 %v41
  %277 = vmatpush1.msra.mxu0 %v40
  %278 = vmatprep.subr.mxu0 %v45
  %279 = vmatpush1.msra.mxu0 %v44
  %280 = vmatprep.subr.mxu0 %v49
  %281 = vmatpush1.msra.mxu0 %v48
  %282 = vmatprep.subr.mxu0 %v53
  %283 = vmatpush1.msra.mxu0 %v52
  %284 = vmatprep.subr.mxu0 %v57
  %285 = vmatpush1.msra.mxu0 %v56
  %286 = vmatprep.subr.mxu0 %v61
  %287 = vmatpush1.msra.mxu0 %v60
  %288 = vmatprep.subr.mxu0 %v65
  %289 = vmatpush1.msra.mxu0 %v64
  %290 = vmatprep.subr.mxu0 %v69
  %291 = vmatpush1.msra.mxu0 %v68
  %292 = vmatprep.subr.mxu0 %v73
  %293 = vmatpush1.msra.mxu0 %v72
  %294 = vmatprep.subr.mxu0 %v77
  %295 = vmatpush1.msra.mxu0 %v76
  %296 = vmatprep.subr.mxu0 %v81
  %297 = vmatpush1.msra.mxu0 %v80
  %298 = vmatprep.subr.mxu0 0.0
  %299 = vmatpush1.msra.mxu0 0.0
  %300 = vmatprep.subr.mxu0 0.0
  %301 = vmatpush1.msra.mxu0 0.0
  %302 = vmatprep.subr.mxu0 0.0
  %303 = vmatpush1.msra.mxu0 0.0
  %304 = vmatprep.subr.mxu0 0.0
  %305 = vmatpush1.msra.mxu0 0.0
  %306 = vmatprep.subr.mxu0 0.0
  %307 = vmatpush1.msra.mxu0 0.0
  %308 = vmatprep.subr.mxu0 0.0
  %309 = vmatpush1.msra.mxu0 0.0
  %310 = vmatprep.subr.mxu0 0.0
  %311 = vmatpush1.msra.mxu0 0.0
  %312 = vmatprep.subr.mxu0 0.0
  %313 = vmatpush1.msra.mxu0 0.0
  %314 = vmatprep.subr.mxu0 0.0
  %315 = vmatpush1.msra.mxu0 0.0
  %316 = vmatprep.subr.mxu0 0.0
  %317 = vmatpush1.msra.mxu0 0.0
  %318 = vmatprep.subr.mxu0 0.0
  %319 = vmatpush1.msra.mxu0 0.0
  %320 = vmatprep.subr.mxu0 0.0
  %321 = vmatpush1.msra.mxu0 0.0
  %322 = vmatprep.subr.mxu0 0.0
  %323 = vmatpush1.msra.mxu0 0.0
  %324 = vmatprep.subr.mxu0 0.0
  %325 = vmatpush1.msra.mxu0 0.0
  %326 = vmatprep.subr.mxu0 0.0
  %327 = vmatpush1.msra.mxu0 0.0
  %328 = vmatprep.subr.mxu0 0.0
  %329 = vmatpush1.msra.mxu0 0.0
  %330 = vmatprep.mubr.f32.mxu0 0.0
  %331 = vmatmul.mubr.f32.gmra.mrb[0].mxu0 %v259
  %v332 = vpop.f32.mrb[0].mxu0
  %v333 = vadd.f32 0.0, %v332
  %v334 = vpop.f32.mrb[0].mxu0
  %v335 = vadd.f32 0.0, %v334
  %336 = vdwg.mxu0
  %337 = vmatprep.subr.mxu0 %v23
  %338 = vmatpush1.msra.mxu0 %v22
  %339 = vmatprep.subr.mxu0 %v27
  %340 = vmatpush1.msra.mxu0 %v26
  %341 = vmatprep.subr.mxu0 %v31
  %342 = vmatpush1.msra.mxu0 %v30
  %343 = vmatprep.subr.mxu0 %v35
  %344 = vmatpush1.msra.mxu0 %v34
  %345 = vmatprep.subr.mxu0 %v39
  %346 = vmatpush1.msra.mxu0 %v38
  %347 = vmatprep.subr.mxu0 %v43
  %348 = vmatpush1.msra.mxu0 %v42
  %349 = vmatprep.subr.mxu0 %v47
  %350 = vmatpush1.msra.mxu0 %v46
  %351 = vmatprep.subr.mxu0 %v51
  %352 = vmatpush1.msra.mxu0 %v50
  %353 = vmatprep.subr.mxu0 %v55
  %354 = vmatpush1.msra.mxu0 %v54
  %355 = vmatprep.subr.mxu0 %v59
  %356 = vmatpush1.msra.mxu0 %v58
  %357 = vmatprep.subr.mxu0 %v63
  %358 = vmatpush1.msra.mxu0 %v62
  %359 = vmatprep.subr.mxu0 %v67
  %360 = vmatpush1.msra.mxu0 %v66
  %361 = vmatprep.subr.mxu0 %v71
  %362 = vmatpush1.msra.mxu0 %v70
  %363 = vmatprep.subr.mxu0 %v75
  %364 = vmatpush1.msra.mxu0 %v74
  %365 = vmatprep.subr.mxu0 %v79
  %366 = vmatpush1.msra.mxu0 %v78
  %367 = vmatprep.subr.mxu0 %v83
  %368 = vmatpush1.msra.mxu0 %v82
  %369 = vmatprep.subr.mxu0 0.0
  %370 = vmatpush1.msra.mxu0 0.0
  %371 = vmatprep.subr.mxu0 0.0
  %372 = vmatpush1.msra.mxu0 0.0
  %373 = vmatprep.subr.mxu0 0.0
  %374 = vmatpush1.msra.mxu0 0.0
  %375 = vmatprep.subr.mxu0 0.0
  %376 = vmatpush1.msra.mxu0 0.0
  %377 = vmatprep.subr.mxu0 0.0
  %378 = vmatpush1.msra.mxu0 0.0
  %379 = vmatprep.subr.mxu0 0.0
  %380 = vmatpush1.msra.mxu0 0.0
  %381 = vmatprep.subr.mxu0 0.0
  %382 = vmatpush1.msra.mxu0 0.0
  %383 = vmatprep.subr.mxu0 0.0
  %384 = vmatpush1.msra.mxu0 0.0
  %385 = vmatprep.subr.mxu0 0.0
  %386 = vmatpush1.msra.mxu0 0.0
  %387 = vmatprep.subr.mxu0 0.0
  %388 = vmatpush1.msra.mxu0 0.0
  %389 = vmatprep.subr.mxu0 0.0
  %390 = vmatpush1.msra.mxu0 0.0
  %391 = vmatprep.subr.mxu0 0.0
  %392 = vmatpush1.msra.mxu0 0.0
  %393 = vmatprep.subr.mxu0 0.0
  %394 = vmatpush1.msra.mxu0 0.0
  %395 = vmatprep.subr.mxu0 0.0
  %396 = vmatpush1.msra.mxu0 0.0
  %397 = vmatprep.subr.mxu0 0.0
  %398 = vmatpush1.msra.mxu0 0.0
  %399 = vmatprep.subr.mxu0 0.0
  %400 = vmatpush1.msra.mxu0 0.0
  %401 = vmatprep.mubr.f32.mxu0 0.0
  %402 = vmatmul.mubr.f32.gmra.mrb[0].mxu0 %v259
  %v403 = vpop.f32.mrb[0].mxu0
  %v404 = vadd.f32 0.0, %v403
  %v405 = vpop.f32.mrb[0].mxu0
  %v406 = vadd.f32 0.0, %v405
  %407 = vdwg.mxu0
  %v408 = vadd.f32 %v262, %v333
  %v409 = vadd.f32 %v263, %v335
  %v410 = vadd.f32 %v264, %v404
  %v411 = vadd.f32 %v265, %v406
  %v412 = vxor.u32 %v408, 2147483648
  %v413 = vxor.u32 %v409, 2147483648
  %v414 = vxor.u32 %v410, 2147483648
  %v415 = vmul.f32 %v412, 1.442695
  %v416 = vpow.pop %v415
  %v417 = vmul.f32 %v413, 1.442695
  %v418 = vpow.pop %v417
  %v419 = vmul.f32 %v414, 1.442695
  %v420 = vpow.pop %v419
  %v421 = vadd.f32 %v416, 1.0
  %v422 = vadd.f32 %v418, 1.0
  %v423 = vadd.f32 %v420, 1.0
  %v424 = vrcp.pop %v421
  %v425 = vmul.f32 1.0, %v424
  %v426 = vrcp.pop %v422
  %v427 = vmul.f32 1.0, %v426
  %v428 = vrcp.pop %v423
  %v429 = vmul.f32 1.0, %v428
  %v430 = vtanh.pop %v411
  %v431 = vmul.f32 %v427, %v257
  %v432 = vmul.f32 %v425, %v430
  %v433 = vadd.f32 %v431, %v432
  %v434 = vtanh.pop %v433
  %v435 = vmul.f32 %v429, %v434
  %s436 = scalar_lea.vmem %s4, 8
  %437 = vst [vmem:[%s436] sm:$0xff] %v435
  %s438 = scalar_lea.vmem %s0, 64
  %v439 = vld [vmem:[%s438] sm:$0xff]
  %v440 = vld [vmem:[%s438 + $0x8] sm:$0xff]
  %v441 = vld [vmem:[%s438 + $0x10] sm:$0xff]
  %v442 = vld [vmem:[%s438 + $0x18] sm:$0xff]
  %443 = vmatprep.subr.mxu0 %v21
  %444 = vmatpush1.msra.mxu0 %v20
  %445 = vmatprep.subr.mxu0 %v25
  %446 = vmatpush1.msra.mxu0 %v24
  %447 = vmatprep.subr.mxu0 %v29
  %448 = vmatpush1.msra.mxu0 %v28
  %449 = vmatprep.subr.mxu0 %v33
  %450 = vmatpush1.msra.mxu0 %v32
  %451 = vmatprep.subr.mxu0 %v37
  %452 = vmatpush1.msra.mxu0 %v36
  %453 = vmatprep.subr.mxu0 %v41
  %454 = vmatpush1.msra.mxu0 %v40
  %455 = vmatprep.subr.mxu0 %v45
  %456 = vmatpush1.msra.mxu0 %v44
  %457 = vmatprep.subr.mxu0 %v49
  %458 = vmatpush1.msra.mxu0 %v48
  %459 = vmatprep.subr.mxu0 %v53
  %460 = vmatpush1.msra.mxu0 %v52
  %461 = vmatprep.subr.mxu0 %v57
  %462 = vmatpush1.msra.mxu0 %v56
  %463 = vmatprep.subr.mxu0 %v61
  %464 = vmatpush1.msra.mxu0 %v60
  %465 = vmatprep.subr.mxu0 %v65
  %466 = vmatpush1.msra.mxu0 %v64
  %467 = vmatprep.subr.mxu0 %v69
  %468 = vmatpush1.msra.mxu0 %v68
  %469 = vmatprep.subr.mxu0 %v73
  %470 = vmatpush1.msra.mxu0 %v72
  %471 = vmatprep.subr.mxu0 %v77
  %472 = vmatpush1.msra.mxu0 %v76
  %473 = vmatprep.subr.mxu0 %v81
  %474 = vmatpush1.msra.mxu0 %v80
  %475 = vmatprep.subr.mxu0 0.0
  %476 = vmatpush1.msra.mxu0 0.0
  %477 = vmatprep.subr.mxu0 0.0
  %478 = vmatpush1.msra.mxu0 0.0
  %479 = vmatprep.subr.mxu0 0.0
  %480 = vmatpush1.msra.mxu0 0.0
  %481 = vmatprep.subr.mxu0 0.0
  %482 = vmatpush1.msra.mxu0 0.0
  %483 = vmatprep.subr.mxu0 0.0
  %484 = vmatpush1.msra.mxu0 0.0
  %485 = vmatprep.subr.mxu0 0.0
  %486 = vmatpush1.msra.mxu0 0.0
  %487 = vmatprep.subr.mxu0 0.0
  %488 = vmatpush1.msra.mxu0 0.0
  %489 = vmatprep.subr.mxu0 0.0
  %490 = vmatpush1.msra.mxu0 0.0
  %491 = vmatprep.subr.mxu0 0.0
  %492 = vmatpush1.msra.mxu0 0.0
  %493 = vmatprep.subr.mxu0 0.0
  %494 = vmatpush1.msra.mxu0 0.0
  %495 = vmatprep.subr.mxu0 0.0
  %496 = vmatpush1.msra.mxu0 0.0
  %497 = vmatprep.subr.mxu0 0.0
  %498 = vmatpush1.msra.mxu0 0.0
  %499 = vmatprep.subr.mxu0 0.0
  %500 = vmatpush1.msra.mxu0 0.0
  %501 = vmatprep.subr.mxu0 0.0
  %502 = vmatpush1.msra.mxu0 0.0
  %503 = vmatprep.subr.mxu0 0.0
  %504 = vmatpush1.msra.mxu0 0.0
  %505 = vmatprep.subr.mxu0 0.0
  %506 = vmatpush1.msra.mxu0 0.0
  %507 = vmatprep.mubr.f32.mxu0 0.0
  %508 = vmatmul.mubr.f32.gmra.mrb[0].mxu0 %v435
  %v509 = vpop.f32.mrb[0].mxu0
  %v510 = vadd.f32 0.0, %v509
  %v511 = vpop.f32.mrb[0].mxu0
  %v512 = vadd.f32 0.0, %v511
  %513 = vdwg.mxu0
  %514 = vmatprep.subr.mxu0 %v23
  %515 = vmatpush1.msra.mxu0 %v22
  %516 = vmatprep.subr.mxu0 %v27
  %517 = vmatpush1.msra.mxu0 %v26
  %518 = vmatprep.subr.mxu0 %v31
  %519 = vmatpush1.msra.mxu0 %v30
  %520 = vmatprep.subr.mxu0 %v35
  %521 = vmatpush1.msra.mxu0 %v34
  %522 = vmatprep.subr.mxu0 %v39
  %523 = vmatpush1.msra.mxu0 %v38
  %524 = vmatprep.subr.mxu0 %v43
  %525 = vmatpush1.msra.mxu0 %v42
  %526 = vmatprep.subr.mxu0 %v47
  %527 = vmatpush1.msra.mxu0 %v46
  %528 = vmatprep.subr.mxu0 %v51
  %529 = vmatpush1.msra.mxu0 %v50
  %530 = vmatprep.subr.mxu0 %v55
  %531 = vmatpush1.msra.mxu0 %v54
  %532 = vmatprep.subr.mxu0 %v59
  %533 = vmatpush1.msra.mxu0 %v58
  %534 = vmatprep.subr.mxu0 %v63
  %535 = vmatpush1.msra.mxu0 %v62
  %536 = vmatprep.subr.mxu0 %v67
  %537 = vmatpush1.msra.mxu0 %v66
  %538 = vmatprep.subr.mxu0 %v71
  %539 = vmatpush1.msra.mxu0 %v70
  %540 = vmatprep.subr.mxu0 %v75
  %541 = vmatpush1.msra.mxu0 %v74
  %542 = vmatprep.subr.mxu0 %v79
  %543 = vmatpush1.msra.mxu0 %v78
  %544 = vmatprep.subr.mxu0 %v83
  %545 = vmatpush1.msra.mxu0 %v82
  %546 = vmatprep.subr.mxu0 0.0
  %547 = vmatpush1.msra.mxu0 0.0
  %548 = vmatprep.subr.mxu0 0.0
  %549 = vmatpush1.msra.mxu0 0.0
  %550 = vmatprep.subr.mxu0 0.0
  %551 = vmatpush1.msra.mxu0 0.0
  %552 = vmatprep.subr.mxu0 0.0
  %553 = vmatpush1.msra.mxu0 0.0
  %554 = vmatprep.subr.mxu0 0.0
  %555 = vmatpush1.msra.mxu0 0.0
  %556 = vmatprep.subr.mxu0 0.0
  %557 = vmatpush1.msra.mxu0 0.0
  %558 = vmatprep.subr.mxu0 0.0
  %559 = vmatpush1.msra.mxu0 0.0
  %560 = vmatprep.subr.mxu0 0.0
  %561 = vmatpush1.msra.mxu0 0.0
  %562 = vmatprep.subr.mxu0 0.0
  %563 = vmatpush1.msra.mxu0 0.0
  %564 = vmatprep.subr.mxu0 0.0
  %565 = vmatpush1.msra.mxu0 0.0
  %566 = vmatprep.subr.mxu0 0.0
  %567 = vmatpush1.msra.mxu0 0.0
  %568 = vmatprep.subr.mxu0 0.0
  %569 = vmatpush1.msra.mxu0 0.0
  %570 = vmatprep.subr.mxu0 0.0
  %571 = vmatpush1.msra.mxu0 0.0
  %572 = vmatprep.subr.mxu0 0.0
  %573 = vmatpush1.msra.mxu0 0.0
  %574 = vmatprep.subr.mxu0 0.0
  %575 = vmatpush1.msra.mxu0 0.0
  %576 = vmatprep.subr.mxu0 0.0
  %577 = vmatpush1.msra.mxu0 0.0
  %578 = vmatprep.mubr.f32.mxu0 0.0
  %579 = vmatmul.mubr.f32.gmra.mrb[0].mxu0 %v435
  %v580 = vpop.f32.mrb[0].mxu0
  %v581 = vadd.f32 0.0, %v580
  %v582 = vpop.f32.mrb[0].mxu0
  %v583 = vadd.f32 0.0, %v582
  %584 = vdwg.mxu0
  %v585 = vadd.f32 %v439, %v510
  %v586 = vadd.f32 %v440, %v512
  %v587 = vadd.f32 %v441, %v581
  %v588 = vadd.f32 %v442, %v583
  %v589 = vxor.u32 %v585, 2147483648
  %v590 = vxor.u32 %v586, 2147483648
  %v591 = vxor.u32 %v587, 2147483648
  %v592 = vmul.f32 %v589, 1.442695
  %v593 = vpow.pop %v592
  %v594 = vmul.f32 %v590, 1.442695
  %v595 = vpow.pop %v594
  %v596 = vmul.f32 %v591, 1.442695
  %v597 = vpow.pop %v596
  %v598 = vadd.f32 %v593, 1.0
  %v599 = vadd.f32 %v595, 1.0
  %v600 = vadd.f32 %v597, 1.0
  %v601 = vrcp.pop %v598
  %v602 = vmul.f32 1.0, %v601
  %v603 = vrcp.pop %v599
  %v604 = vmul.f32 1.0, %v603
  %v605 = vrcp.pop %v600
  %v606 = vmul.f32 1.0, %v605
  %v607 = vtanh.pop %v588
  %v608 = vmul.f32 %v604, %v433
  %v609 = vmul.f32 %v602, %v607
  %v610 = vadd.f32 %v608, %v609
  %v611 = vtanh.pop %v610
  %v612 = vmul.f32 %v606, %v611
  %s613 = scalar_lea.vmem %s4, 16
  %614 = vst [vmem:[%s613] sm:$0xff] %v612
  %s615 = scalar_lea.vmem %s0, 96
  %v616 = vld [vmem:[%s615] sm:$0xff]
  %v617 = vld [vmem:[%s615 + $0x8] sm:$0xff]
  %v618 = vld [vmem:[%s615 + $0x10] sm:$0xff]
  %v619 = vld [vmem:[%s615 + $0x18] sm:$0xff]
  %620 = vmatprep.subr.mxu0 %v21
  %621 = vmatpush1.msra.mxu0 %v20
  %622 = vmatprep.subr.mxu0 %v25
  %623 = vmatpush1.msra.mxu0 %v24
  %624 = vmatprep.subr.mxu0 %v29
  %625 = vmatpush1.msra.mxu0 %v28
  %626 = vmatprep.subr.mxu0 %v33
  %627 = vmatpush1.msra.mxu0 %v32
  %628 = vmatprep.subr.mxu0 %v37
  %629 = vmatpush1.msra.mxu0 %v36
  %630 = vmatprep.subr.mxu0 %v41
  %631 = vmatpush1.msra.mxu0 %v40
  %632 = vmatprep.subr.mxu0 %v45
  %633 = vmatpush1.msra.mxu0 %v44
  %634 = vmatprep.subr.mxu0 %v49
  %635 = vmatpush1.msra.mxu0 %v48
  %636 = vmatprep.subr.mxu0 %v53
  %637 = vmatpush1.msra.mxu0 %v52
  %638 = vmatprep.subr.mxu0 %v57
  %639 = vmatpush1.msra.mxu0 %v56
  %640 = vmatprep.subr.mxu0 %v61
  %641 = vmatpush1.msra.mxu0 %v60
  %642 = vmatprep.subr.mxu0 %v65
  %643 = vmatpush1.msra.mxu0 %v64
  %644 = vmatprep.subr.mxu0 %v69
  %645 = vmatpush1.msra.mxu0 %v68
  %646 = vmatprep.subr.mxu0 %v73
  %647 = vmatpush1.msra.mxu0 %v72
  %648 = vmatprep.subr.mxu0 %v77
  %649 = vmatpush1.msra.mxu0 %v76
  %650 = vmatprep.subr.mxu0 %v81
  %651 = vmatpush1.msra.mxu0 %v80
  %652 = vmatprep.subr.mxu0 0.0
  %653 = vmatpush1.msra.mxu0 0.0
  %654 = vmatprep.subr.mxu0 0.0
  %655 = vmatpush1.msra.mxu0 0.0
  %656 = vmatprep.subr.mxu0 0.0
  %657 = vmatpush1.msra.mxu0 0.0
  %658 = vmatprep.subr.mxu0 0.0
  %659 = vmatpush1.msra.mxu0 0.0
  %660 = vmatprep.subr.mxu0 0.0
  %661 = vmatpush1.msra.mxu0 0.0
  %662 = vmatprep.subr.mxu0 0.0
  %663 = vmatpush1.msra.mxu0 0.0
  %664 = vmatprep.subr.mxu0 0.0
  %665 = vmatpush1.msra.mxu0 0.0
  %666 = vmatprep.subr.mxu0 0.0
  %667 = vmatpush1.msra.mxu0 0.0
  %668 = vmatprep.subr.mxu0 0.0
  %669 = vmatpush1.msra.mxu0 0.0
  %670 = vmatprep.subr.mxu0 0.0
  %671 = vmatpush1.msra.mxu0 0.0
  %672 = vmatprep.subr.mxu0 0.0
  %673 = vmatpush1.msra.mxu0 0.0
  %674 = vmatprep.subr.mxu0 0.0
  %675 = vmatpush1.msra.mxu0 0.0
  %676 = vmatprep.subr.mxu0 0.0
  %677 = vmatpush1.msra.mxu0 0.0
  %678 = vmatprep.subr.mxu0 0.0
  %679 = vmatpush1.msra.mxu0 0.0
  %680 = vmatprep.subr.mxu0 0.0
  %681 = vmatpush1.msra.mxu0 0.0
  %682 = vmatprep.subr.mxu0 0.0
  %683 = vmatpush1.msra.mxu0 0.0
  %684 = vmatprep.mubr.f32.mxu0 0.0
  %685 = vmatmul.mubr.f32.gmra.mrb[0].mxu0 %v612
  %v686 = vpop.f32.mrb[0].mxu0
  %v687 = vadd.f32 0.0, %v686
  %v688 = vpop.f32.mrb[0].mxu0
  %v689 = vadd.f32 0.0, %v688
  %690 = vdwg.mxu0
  %691 = vmatprep.subr.mxu0 %v23
  %692 = vmatpush1.msra.mxu0 %v22
  %693 = vmatprep.subr.mxu0 %v27
  %694 = vmatpush1.msra.mxu0 %v26
  %695 = vmatprep.subr.mxu0 %v31
  %696 = vmatpush1.msra.mxu0 %v30
  %697 = vmatprep.subr.mxu0 %v35
  %698 = vmatpush1.msra.mxu0 %v34
  %699 = vmatprep.subr.mxu0 %v39
  %700 = vmatpush1.msra.mxu0 %v38
  %701 = vmatprep.subr.mxu0 %v43
  %702 = vmatpush1.msra.mxu0 %v42
  %703 = vmatprep.subr.mxu0 %v47
  %704 = vmatpush1.msra.mxu0 %v46
  %705 = vmatprep.subr.mxu0 %v51
  %706 = vmatpush1.msra.mxu0 %v50
  %707 = vmatprep.subr.mxu0 %v55
  %708 = vmatpush1.msra.mxu0 %v54
  %709 = vmatprep.subr.mxu0 %v59
  %710 = vmatpush1.msra.mxu0 %v58
  %711 = vmatprep.subr.mxu0 %v63
  %712 = vmatpush1.msra.mxu0 %v62
  %713 = vmatprep.subr.mxu0 %v67
  %714 = vmatpush1.msra.mxu0 %v66
  %715 = vmatprep.subr.mxu0 %v71
  %716 = vmatpush1.msra.mxu0 %v70
  %717 = vmatprep.subr.mxu0 %v75
  %718 = vmatpush1.msra.mxu0 %v74
  %719 = vmatprep.subr.mxu0 %v79
  %720 = vmatpush1.msra.mxu0 %v78
  %721 = vmatprep.subr.mxu0 %v83
  %722 = vmatpush1.msra.mxu0 %v82
  %723 = vmatprep.subr.mxu0 0.0
  %724 = vmatpush1.msra.mxu0 0.0
  %725 = vmatprep.subr.mxu0 0.0
  %726 = vmatpush1.msra.mxu0 0.0
  %727 = vmatprep.subr.mxu0 0.0
  %728 = vmatpush1.msra.mxu0 0.0
  %729 = vmatprep.subr.mxu0 0.0
  %730 = vmatpush1.msra.mxu0 0.0
  %731 = vmatprep.subr.mxu0 0.0
  %732 = vmatpush1.msra.mxu0 0.0
  %733 = vmatprep.subr.mxu0 0.0
  %734 = vmatpush1.msra.mxu0 0.0
  %735 = vmatprep.subr.mxu0 0.0
  %736 = vmatpush1.msra.mxu0 0.0
  %737 = vmatprep.subr.mxu0 0.0
  %738 = vmatpush1.msra.mxu0 0.0
  %739 = vmatprep.subr.mxu0 0.0
  %740 = vmatpush1.msra.mxu0 0.0
  %741 = vmatprep.subr.mxu0 0.0
  %742 = vmatpush1.msra.mxu0 0.0
  %743 = vmatprep.subr.mxu0 0.0
  %744 = vmatpush1.msra.mxu0 0.0
  %745 = vmatprep.subr.mxu0 0.0
  %746 = vmatpush1.msra.mxu0 0.0
  %747 = vmatprep.subr.mxu0 0.0
  %748 = vmatpush1.msra.mxu0 0.0
  %749 = vmatprep.subr.mxu0 0.0
  %750 = vmatpush1.msra.mxu0 0.0
  %751 = vmatprep.subr.mxu0 0.0
  %752 = vmatpush1.msra.mxu0 0.0
  %753 = vmatprep.subr.mxu0 0.0
  %754 = vmatpush1.msra.mxu0 0.0
  %755 = vmatprep.mubr.f32.mxu0 0.0
  %756 = vmatmul.mubr.f32.gmra.mrb[0].mxu0 %v612
  %v757 = vpop.f32.mrb[0].mxu0
  %v758 = vadd.f32 0.0, %v757
  %v759 = vpop.f32.mrb[0].mxu0
  %v760 = vadd.f32 0.0, %v759
  %761 = vdwg.mxu0
  %v762 = vadd.f32 %v616, %v687
  %v763 = vadd.f32 %v617, %v689
  %v764 = vadd.f32 %v618, %v758
  %v765 = vadd.f32 %v619, %v760
  %v766 = vxor.u32 %v762, 2147483648
  %v767 = vxor.u32 %v763, 2147483648
  %v768 = vxor.u32 %v764, 2147483648
  %v769 = vmul.f32 %v766, 1.442695
  %v770 = vpow.pop %v769
  %v771 = vmul.f32 %v767, 1.442695
  %v772 = vpow.pop %v771
  %v773 = vmul.f32 %v768, 1.442695
  %v774 = vpow.pop %v773
  %v775 = vadd.f32 %v770, 1.0
  %v776 = vadd.f32 %v772, 1.0
  %v777 = vadd.f32 %v774, 1.0
  %v778 = vrcp.pop %v775
  %v779 = vmul.f32 1.0, %v778
  %v780 = vrcp.pop %v776
  %v781 = vmul.f32 1.0, %v780
  %v782 = vrcp.pop %v777
  %v783 = vmul.f32 1.0, %v782
  %v784 = vtanh.pop %v765
  %v785 = vmul.f32 %v781, %v610
  %v786 = vmul.f32 %v779, %v784
  %v787 = vadd.f32 %v785, %v786
  %v788 = vtanh.pop %v787
  %v789 = vmul.f32 %v783, %v788
  %s790 = scalar_lea.vmem %s4, 24
  %791 = vst [vmem:[%s790] sm:$0xff] %v789
  %s792 = scalar_lea.vmem %s0, 128
  %v793 = vld [vmem:[%s792] sm:$0xff]
  %v794 = vld [vmem:[%s792 + $0x8] sm:$0xff]
  %v795 = vld [vmem:[%s792 + $0x10] sm:$0xff]
  %v796 = vld [vmem:[%s792 + $0x18] sm:$0xff]
  %797 = vmatprep.subr.mxu0 %v21
  %798 = vmatpush1.msra.mxu0 %v20
  %799 = vmatprep.subr.mxu0 %v25
  %800 = vmatpush1.msra.mxu0 %v24
  %801 = vmatprep.subr.mxu0 %v29
  %802 = vmatpush1.msra.mxu0 %v28
  %803 = vmatprep.subr.mxu0 %v33
  %804 = vmatpush1.msra.mxu0 %v32
  %805 = vmatprep.subr.mxu0 %v37
  %806 = vmatpush1.msra.mxu0 %v36
  %807 = vmatprep.subr.mxu0 %v41
  %808 = vmatpush1.msra.mxu0 %v40
  %809 = vmatprep.subr.mxu0 %v45
  %810 = vmatpush1.msra.mxu0 %v44
  %811 = vmatprep.subr.mxu0 %v49
  %812 = vmatpush1.msra.mxu0 %v48
  %813 = vmatprep.subr.mxu0 %v53
  %814 = vmatpush1.msra.mxu0 %v52
  %815 = vmatprep.subr.mxu0 %v57
  %816 = vmatpush1.msra.mxu0 %v56
  %817 = vmatprep.subr.mxu0 %v61
  %818 = vmatpush1.msra.mxu0 %v60
  %819 = vmatprep.subr.mxu0 %v65
  %820 = vmatpush1.msra.mxu0 %v64
  %821 = vmatprep.subr.mxu0 %v69
  %822 = vmatpush1.msra.mxu0 %v68
  %823 = vmatprep.subr.mxu0 %v73
  %824 = vmatpush1.msra.mxu0 %v72
  %825 = vmatprep.subr.mxu0 %v77
  %826 = vmatpush1.msra.mxu0 %v76
  %827 = vmatprep.subr.mxu0 %v81
  %828 = vmatpush1.msra.mxu0 %v80
  %829 = vmatprep.subr.mxu0 0.0
  %830 = vmatpush1.msra.mxu0 0.0
  %831 = vmatprep.subr.mxu0 0.0
  %832 = vmatpush1.msra.mxu0 0.0
  %833 = vmatprep.subr.mxu0 0.0
  %834 = vmatpush1.msra.mxu0 0.0
  %835 = vmatprep.subr.mxu0 0.0
  %836 = vmatpush1.msra.mxu0 0.0
  %837 = vmatprep.subr.mxu0 0.0
  %838 = vmatpush1.msra.mxu0 0.0
  %839 = vmatprep.subr.mxu0 0.0
  %840 = vmatpush1.msra.mxu0 0.0
  %841 = vmatprep.subr.mxu0 0.0
  %842 = vmatpush1.msra.mxu0 0.0
  %843 = vmatprep.subr.mxu0 0.0
  %844 = vmatpush1.msra.mxu0 0.0
  %845 = vmatprep.subr.mxu0 0.0
  %846 = vmatpush1.msra.mxu0 0.0
  %847 = vmatprep.subr.mxu0 0.0
  %848 = vmatpush1.msra.mxu0 0.0
  %849 = vmatprep.subr.mxu0 0.0
  %850 = vmatpush1.msra.mxu0 0.0
  %851 = vmatprep.subr.mxu0 0.0
  %852 = vmatpush1.msra.mxu0 0.0
  %853 = vmatprep.subr.mxu0 0.0
  %854 = vmatpush1.msra.mxu0 0.0
  %855 = vmatprep.subr.mxu0 0.0
  %856 = vmatpush1.msra.mxu0 0.0
  %857 = vmatprep.subr.mxu0 0.0
  %858 = vmatpush1.msra.mxu0 0.0
  %859 = vmatprep.subr.mxu0 0.0
  %860 = vmatpush1.msra.mxu0 0.0
  %861 = vmatprep.mubr.f32.mxu0 0.0
  %862 = vmatmul.mubr.f32.gmra.mrb[0].mxu0 %v789
  %v863 = vpop.f32.mrb[0].mxu0
  %v864 = vadd.f32 0.0, %v863
  %v865 = vpop.f32.mrb[0].mxu0
  %v866 = vadd.f32 0.0, %v865
  %867 = vdwg.mxu0
  %868 = vmatprep.subr.mxu0 %v23
  %869 = vmatpush1.msra.mxu0 %v22
  %870 = vmatprep.subr.mxu0 %v27
  %871 = vmatpush1.msra.mxu0 %v26
  %872 = vmatprep.subr.mxu0 %v31
  %873 = vmatpush1.msra.mxu0 %v30
  %874 = vmatprep.subr.mxu0 %v35
  %875 = vmatpush1.msra.mxu0 %v34
  %876 = vmatprep.subr.mxu0 %v39
  %877 = vmatpush1.msra.mxu0 %v38
  %878 = vmatprep.subr.mxu0 %v43
  %879 = vmatpush1.msra.mxu0 %v42
  %880 = vmatprep.subr.mxu0 %v47
  %881 = vmatpush1.msra.mxu0 %v46
  %882 = vmatprep.subr.mxu0 %v51
  %883 = vmatpush1.msra.mxu0 %v50
  %884 = vmatprep.subr.mxu0 %v55
  %885 = vmatpush1.msra.mxu0 %v54
  %886 = vmatprep.subr.mxu0 %v59
  %887 = vmatpush1.msra.mxu0 %v58
  %888 = vmatprep.subr.mxu0 %v63
  %889 = vmatpush1.msra.mxu0 %v62
  %890 = vmatprep.subr.mxu0 %v67
  %891 = vmatpush1.msra.mxu0 %v66
  %892 = vmatprep.subr.mxu0 %v71
  %893 = vmatpush1.msra.mxu0 %v70
  %894 = vmatprep.subr.mxu0 %v75
  %895 = vmatpush1.msra.mxu0 %v74
  %896 = vmatprep.subr.mxu0 %v79
  %897 = vmatpush1.msra.mxu0 %v78
  %898 = vmatprep.subr.mxu0 %v83
  %899 = vmatpush1.msra.mxu0 %v82
  %900 = vmatprep.subr.mxu0 0.0
  %901 = vmatpush1.msra.mxu0 0.0
  %902 = vmatprep.subr.mxu0 0.0
  %903 = vmatpush1.msra.mxu0 0.0
  %904 = vmatprep.subr.mxu0 0.0
  %905 = vmatpush1.msra.mxu0 0.0
  %906 = vmatprep.subr.mxu0 0.0
  %907 = vmatpush1.msra.mxu0 0.0
  %908 = vmatprep.subr.mxu0 0.0
  %909 = vmatpush1.msra.mxu0 0.0
  %910 = vmatprep.subr.mxu0 0.0
  %911 = vmatpush1.msra.mxu0 0.0
  %912 = vmatprep.subr.mxu0 0.0
  %913 = vmatpush1.msra.mxu0 0.0
  %914 = vmatprep.subr.mxu0 0.0
  %915 = vmatpush1.msra.mxu0 0.0
  %916 = vmatprep.subr.mxu0 0.0
  %917 = vmatpush1.msra.mxu0 0.0
  %918 = vmatprep.subr.mxu0 0.0
  %919 = vmatpush1.msra.mxu0 0.0
  %920 = vmatprep.subr.mxu0 0.0
  %921 = vmatpush1.msra.mxu0 0.0
  %922 = vmatprep.subr.mxu0 0.0
  %923 = vmatpush1.msra.mxu0 0.0
  %924 = vmatprep.subr.mxu0 0.0
  %925 = vmatpush1.msra.mxu0 0.0
  %926 = vmatprep.subr.mxu0 0.0
  %927 = vmatpush1.msra.mxu0 0.0
  %928 = vmatprep.subr.mxu0 0.0
  %929 = vmatpush1.msra.mxu0 0.0
  %930 = vmatprep.subr.mxu0 0.0
  %931 = vmatpush1.msra.mxu0 0.0
  %932 = vmatprep.mubr.f32.mxu0 0.0
  %933 = vmatmul.mubr.f32.gmra.mrb[0].mxu0 %v789
  %v934 = vpop.f32.mrb[0].mxu0
  %v935 = vadd.f32 0.0, %v934
  %v936 = vpop.f32.mrb[0].mxu0
  %v937 = vadd.f32 0.0, %v936
  %938 = vdwg.mxu0
  %v939 = vadd.f32 %v793, %v864
  %v940 = vadd.f32 %v794, %v866
  %v941 = vadd.f32 %v795, %v935
  %v942 = vadd.f32 %v796, %v937
  %v943 = vxor.u32 %v939, 2147483648
  %v944 = vxor.u32 %v940, 2147483648
  %v945 = vxor.u32 %v941, 2147483648
  %v946 = vmul.f32 %v943, 1.442695
  %v947 = vpow.pop %v946
  %v948 = vmul.f32 %v944, 1.442695
  %v949 = vpow.pop %v948
  %v950 = vmul.f32 %v945, 1.442695
  %v951 = vpow.pop %v950
  %v952 = vadd.f32 %v947, 1.0
  %v953 = vadd.f32 %v949, 1.0
  %v954 = vadd.f32 %v951, 1.0
  %v955 = vrcp.pop %v952
  %v956 = vmul.f32 1.0, %v955
  %v957 = vrcp.pop %v953
  %v958 = vmul.f32 1.0, %v957
  %v959 = vrcp.pop %v954
  %v960 = vmul.f32 1.0, %v959
  %v961 = vtanh.pop %v942
  %v962 = vmul.f32 %v958, %v787
  %v963 = vmul.f32 %v956, %v961
  %v964 = vadd.f32 %v962, %v963
  %v965 = vtanh.pop %v964
  %v966 = vmul.f32 %v960, %v965
  %s967 = scalar_lea.vmem %s4, 32
  %968 = vst [vmem:[%s967] sm:$0xff] %v966
  %s969 = scalar_lea.vmem %s0, 160
  %v970 = vld [vmem:[%s969] sm:$0xff]
  %v971 = vld [vmem:[%s969 + $0x8] sm:$0xff]
  %v972 = vld [vmem:[%s969 + $0x10] sm:$0xff]
  %v973 = vld [vmem:[%s969 + $0x18] sm:$0xff]
  %974 = vmatprep.subr.mxu0 %v21
  %975 = vmatpush1.msra.mxu0 %v20
  %976 = vmatprep.subr.mxu0 %v25
  %977 = vmatpush1.msra.mxu0 %v24
  %978 = vmatprep.subr.mxu0 %v29
  %979 = vmatpush1.msra.mxu0 %v28
  %980 = vmatprep.subr.mxu0 %v33
  %981 = vmatpush1.msra.mxu0 %v32
  %982 = vmatprep.subr.mxu0 %v37
  %983 = vmatpush1.msra.mxu0 %v36
  %984 = vmatprep.subr.mxu0 %v41
  %985 = vmatpush1.msra.mxu0 %v40
  %986 = vmatprep.subr.mxu0 %v45
  %987 = vmatpush1.msra.mxu0 %v44
  %988 = vmatprep.subr.mxu0 %v49
  %989 = vmatpush1.msra.mxu0 %v48
  %990 = vmatprep.subr.mxu0 %v53
  %991 = vmatpush1.msra.mxu0 %v52
  %992 = vmatprep.subr.mxu0 %v57
  %993 = vmatpush1.msra.mxu0 %v56
  %994 = vmatprep.subr.mxu0 %v61
  %995 = vmatpush1.msra.mxu0 %v60
  %996 = vmatprep.subr.mxu0 %v65
  %997 = vmatpush1.msra.mxu0 %v64
  %998 = vmatprep.subr.mxu0 %v69
  %999 = vmatpush1.msra.mxu0 %v68
  %1000 = vmatprep.subr.mxu0 %v73
  %1001 = vmatpush1.msra.mxu0 %v72
  %1002 = vmatprep.subr.mxu0 %v77
  %1003 = vmatpush1.msra.mxu0 %v76
  %1004 = vmatprep.subr.mxu0 %v81
  %1005 = vmatpush1.msra.mxu0 %v80
  %1006 = vmatprep.subr.mxu0 0.0
  %1007 = vmatpush1.msra.mxu0 0.0
  %1008 = vmatprep.subr.mxu0 0.0
  %1009 = vmatpush1.msra.mxu0 0.0
  %1010 = vmatprep.subr.mxu0 0.0
  %1011 = vmatpush1.msra.mxu0 0.0
  %1012 = vmatprep.subr.mxu0 0.0
  %1013 = vmatpush1.msra.mxu0 0.0
  %1014 = vmatprep.subr.mxu0 0.0
  %1015 = vmatpush1.msra.mxu0 0.0
  %1016 = vmatprep.subr.mxu0 0.0
  %1017 = vmatpush1.msra.mxu0 0.0
  %1018 = vmatprep.subr.mxu0 0.0
  %1019 = vmatpush1.msra.mxu0 0.0
  %1020 = vmatprep.subr.mxu0 0.0
  %1021 = vmatpush1.msra.mxu0 0.0
  %1022 = vmatprep.subr.mxu0 0.0
  %1023 = vmatpush1.msra.mxu0 0.0
  %1024 = vmatprep.subr.mxu0 0.0
  %1025 = vmatpush1.msra.mxu0 0.0
  %1026 = vmatprep.subr.mxu0 0.0
  %1027 = vmatpush1.msra.mxu0 0.0
  %1028 = vmatprep.subr.mxu0 0.0
  %1029 = vmatpush1.msra.mxu0 0.0
  %1030 = vmatprep.subr.mxu0 0.0
  %1031 = vmatpush1.msra.mxu0 0.0
  %1032 = vmatprep.subr.mxu0 0.0
  %1033 = vmatpush1.msra.mxu0 0.0
  %1034 = vmatprep.subr.mxu0 0.0
  %1035 = vmatpush1.msra.mxu0 0.0
  %1036 = vmatprep.subr.mxu0 0.0
  %1037 = vmatpush1.msra.mxu0 0.0
  %1038 = vmatprep.mubr.f32.mxu0 0.0
  %1039 = vmatmul.mubr.f32.gmra.mrb[0].mxu0 %v966
  %v1040 = vpop.f32.mrb[0].mxu0
  %v1041 = vadd.f32 0.0, %v1040
  %v1042 = vpop.f32.mrb[0].mxu0
  %v1043 = vadd.f32 0.0, %v1042
  %1044 = vdwg.mxu0
  %1045 = vmatprep.subr.mxu0 %v23
  %1046 = vmatpush1.msra.mxu0 %v22
  %1047 = vmatprep.subr.mxu0 %v27
  %1048 = vmatpush1.msra.mxu0 %v26
  %1049 = vmatprep.subr.mxu0 %v31
  %1050 = vmatpush1.msra.mxu0 %v30
  %1051 = vmatprep.subr.mxu0 %v35
  %1052 = vmatpush1.msra.mxu0 %v34
  %1053 = vmatprep.subr.mxu0 %v39
  %1054 = vmatpush1.msra.mxu0 %v38
  %1055 = vmatprep.subr.mxu0 %v43
  %1056 = vmatpush1.msra.mxu0 %v42
  %1057 = vmatprep.subr.mxu0 %v47
  %1058 = vmatpush1.msra.mxu0 %v46
  %1059 = vmatprep.subr.mxu0 %v51
  %1060 = vmatpush1.msra.mxu0 %v50
  %1061 = vmatprep.subr.mxu0 %v55
  %1062 = vmatpush1.msra.mxu0 %v54
  %1063 = vmatprep.subr.mxu0 %v59
  %1064 = vmatpush1.msra.mxu0 %v58
  %1065 = vmatprep.subr.mxu0 %v63
  %1066 = vmatpush1.msra.mxu0 %v62
  %1067 = vmatprep.subr.mxu0 %v67
  %1068 = vmatpush1.msra.mxu0 %v66
  %1069 = vmatprep.subr.mxu0 %v71
  %1070 = vmatpush1.msra.mxu0 %v70
  %1071 = vmatprep.subr.mxu0 %v75
  %1072 = vmatpush1.msra.mxu0 %v74
  %1073 = vmatprep.subr.mxu0 %v79
  %1074 = vmatpush1.msra.mxu0 %v78
  %1075 = vmatprep.subr.mxu0 %v83
  %1076 = vmatpush1.msra.mxu0 %v82
  %1077 = vmatprep.subr.mxu0 0.0
  %1078 = vmatpush1.msra.mxu0 0.0
  %1079 = vmatprep.subr.mxu0 0.0
  %1080 = vmatpush1.msra.mxu0 0.0
  %1081 = vmatprep.subr.mxu0 0.0
  %1082 = vmatpush1.msra.mxu0 0.0
  %1083 = vmatprep.subr.mxu0 0.0
  %1084 = vmatpush1.msra.mxu0 0.0
  %1085 = vmatprep.subr.mxu0 0.0
  %1086 = vmatpush1.msra.mxu0 0.0
  %1087 = vmatprep.subr.mxu0 0.0
  %1088 = vmatpush1.msra.mxu0 0.0
  %1089 = vmatprep.subr.mxu0 0.0
  %1090 = vmatpush1.msra.mxu0 0.0
  %1091 = vmatprep.subr.mxu0 0.0
  %1092 = vmatpush1.msra.mxu0 0.0
  %1093 = vmatprep.subr.mxu0 0.0
  %1094 = vmatpush1.msra.mxu0 0.0
  %1095 = vmatprep.subr.mxu0 0.0
  %1096 = vmatpush1.msra.mxu0 0.0
  %1097 = vmatprep.subr.mxu0 0.0
  %1098 = vmatpush1.msra.mxu0 0.0
  %1099 = vmatprep.subr.mxu0 0.0
  %1100 = vmatpush1.msra.mxu0 0.0
  %1101 = vmatprep.subr.mxu0 0.0
  %1102 = vmatpush1.msra.mxu0 0.0
  %1103 = vmatprep.subr.mxu0 0.0
  %1104 = vmatpush1.msra.mxu0 0.0
  %1105 = vmatprep.subr.mxu0 0.0
  %1106 = vmatpush1.msra.mxu0 0.0
  %1107 = vmatprep.subr.mxu0 0.0
  %1108 = vmatpush1.msra.mxu0 0.0
  %1109 = vmatprep.mubr.f32.mxu0 0.0
  %1110 = vmatmul.mubr.f32.gmra.mrb[0].mxu0 %v966
  %v1111 = vpop.f32.mrb[0].mxu0
  %v1112 = vadd.f32 0.0, %v1111
  %v1113 = vpop.f32.mrb[0].mxu0
  %v1114 = vadd.f32 0.0, %v1113
  %1115 = vdwg.mxu0
  %v1116 = vadd.f32 %v970, %v1041
  %v1117 = vadd.f32 %v971, %v1043
  %v1118 = vadd.f32 %v972, %v1112
  %v1119 = vadd.f32 %v973, %v1114
  %v1120 = vxor.u32 %v1116, 2147483648
  %v1121 = vxor.u32 %v1117, 2147483648
  %v1122 = vxor.u32 %v1118, 2147483648
  %v1123 = vmul.f32 %v1120, 1.442695
  %v1124 = vpow.pop %v1123
  %v1125 = vmul.f32 %v1121, 1.442695
  %v1126 = vpow.pop %v1125
  %v1127 = vmul.f32 %v1122, 1.442695
  %v1128 = vpow.pop %v1127
  %v1129 = vadd.f32 %v1124, 1.0
  %v1130 = vadd.f32 %v1126, 1.0
  %v1131 = vadd.f32 %v1128, 1.0
  %v1132 = vrcp.pop %v1129
  %v1133 = vmul.f32 1.0, %v1132
  %v1134 = vrcp.pop %v1130
  %v1135 = vmul.f32 1.0, %v1134
  %v1136 = vrcp.pop %v1131
  %v1137 = vmul.f32 1.0, %v1136
  %v1138 = vtanh.pop %v1119
  %v1139 = vmul.f32 %v1135, %v964
  %v1140 = vmul.f32 %v1133, %v1138
  %v1141 = vadd.f32 %v1139, %v1140
  %v1142 = vtanh.pop %v1141
  %v1143 = vmul.f32 %v1137, %v1142
  %s1144 = scalar_lea.vmem %s4, 40
  %1145 = vst [vmem:[%s1144] sm:$0xff] %v1143
  %1146 = vst [vmem:[%s5] sm:$0xff] %v1143
  %1147 = vst [vmem:[%s6] sm:$0xff] %v1141
  // Predicated region
  $region18: #{model_forward.1} parent=0 // pred_check
    _
  $region19: #{model_forward.1} parent=0 // pred_check_branch
    %1149 = sbr.rel (0) target = $region21
  $region20: #{model_forward.1} parent=0 // pred_region
    _
  $region21: #{model_forward.1} parent=0 // pred_fallthru
    _
  // Predicated region
  $region22: #{model_forward.1} parent=0 // pred_check
    _
  $region23: #{model_forward.1} parent=0 // pred_check_branch
    %1151 = sbr.rel (0) target = $region25
  $region24: #{model_forward.1} parent=0 // pred_region
    _
  $region25: #{model_forward.1} parent=0 // pred_fallthru
    _
  // Predicated region
  $region26: #{model_forward.1} parent=0 // pred_check
    _
  $region27: #{model_forward.1} parent=0 // pred_check_branch
    %1153 = sbr.rel (0) target = $region29
  $region28: #{model_forward.1} parent=0 // pred_region
    _
  $region29: #{model_forward.1} parent=0 // pred_fallthru
    _
  // Predicated region
  $region30: #{model_forward.1} parent=0 // pred_check
    _
  $region31: #{model_forward.1} parent=0 // pred_check_branch
    %1155 = sbr.rel (0) target = $region33
  $region32: #{model_forward.1} parent=0 // pred_region
    _
  $region33: #{model_forward.1} parent=0 // pred_fallthru
    _
  // Predicated region
  $region34: #{model_forward.1} parent=0 // pred_check
    _
  $region35: #{model_forward.1} parent=0 // pred_check_branch
    %1157 = sbr.rel (0) target = $region37
  $region36: #{model_forward.1} parent=0 // pred_region
    _
  $region37: #{model_forward.1} parent=0 // pred_fallthru
    _
  // Predicated region
  $region38: #{model_forward.1} parent=0 // pred_check
    _
  $region39: #{model_forward.1} parent=0 // pred_check_branch
    %1159 = sbr.rel (0) target = $region41
  $region40: #{model_forward.1} parent=0 // pred_region
    _
  $region41: #{model_forward.1} parent=0 // pred_fallthru
    _

</llo_original>
